<compile_context>
chip_gen: v7x
topology: tpu7x:2x2x1
jax: 0.10.0
libtpu: 0.0.40
codegen_flags: <defaults>
</compile_context>

<pallas_src>
import numpy as np
import jax
import jax.numpy as jnp
from jax.experimental import pallas as pl
from jax.experimental.pallas import tpu as pltpu


def _round_up(x, m):
    return ((x + m - 1) // m) * m


def make_gcc_time(Tx, Ty, epsilon=1e-3, max_tau=None, compute_dtype=jnp.float32):
    """Builds a GCC_time(filt='phat', dim=2, beta=None) forward function."""
    n = Tx + Ty
    K = n // 2 + 1
    max_shift = n // 2
    if max_tau is not None:
        max_shift = int(np.minimum(max_tau, max_shift))
    out_len = 2 * max_shift + 1

    # Lane-aligned padded sizes.
    Kp = _round_up(K, 128)          # padded half-spectrum length
    out_pad = _round_up(out_len, 128)

    np_dtype = np.dtype(jnp.dtype(compute_dtype).name)

    # ---- deterministic "parameters": merged real DFT / inverse-DFT matrices ----
    kf = np.arange(K)

    # Forward: X[k] = sum_t x[t] (cos(th) - i sin(th)), th = 2*pi*k*t/n.
    # Fx = [cos | -sin] zero-padded to (Tx, 2*Kp); x @ Fx -> [Xr | Xi].
    def fwd_matrix(T):
        ang = 2.0 * np.pi * np.arange(T)[:, None] * kf / n       # (T, K)
        F = np.zeros((T, 2 * Kp), dtype=np.float32)
        F[:, :K] = np.cos(ang)
        F[:, Kp:Kp + K] = -np.sin(ang)
        return F.astype(np_dtype)

    Fx = fwd_matrix(Tx)
    Fy = fwd_matrix(Ty)

    # Inverse rDFT with the circular shift folded in:
    #   out[j] = cc[(j - max_shift) mod n]
    #   cc[t]  = (1/n) sum_k w_k (Wr[k] cos(2*pi*k*t/n) - Wi[k] sin(2*pi*k*t/n))
    # Stacked as IM (2*Kp, out_pad) so [Wr | Wi] @ IM = shifted cc directly.
    w = np.full((K,), 2.0)
    w[0] = 1.0
    if n % 2 == 0:
        w[-1] = 1.0
    t_shift = (np.arange(out_len) - max_shift) % n                # (out_len,)
    ang_i = 2.0 * np.pi * kf[:, None] * t_shift[None, :] / n      # (K, out_len)
    IM = np.zeros((2 * Kp, out_pad), dtype=np.float32)
    IM[:K, :out_len] = w[:, None] * np.cos(ang_i) / n
    IM[Kp:Kp + K, :out_len] = -(w[:, None] * np.sin(ang_i) / n)
    IM = IM.astype(np_dtype)

    eps_f32 = np.float32(epsilon)

    def kernel(x_ref, y_ref, fx_ref, fy_ref, im_ref, o_ref):
        # Forward rDFT: one merged matmul per signal (zero-padding to n is
        # implicit: only the Tx/Ty time rows exist).
        X = jnp.dot(x_ref[...], fx_ref[...], preferred_element_type=jnp.float32)
        Y = jnp.dot(y_ref[...], fy_ref[...], preferred_element_type=jnp.float32)
        # Lane-aligned halves (Kp is a multiple of 128 -> free split).
        Xr, Xi = X[:, :Kp], X[:, Kp:]
        Yr, Yi = Y[:, :Kp], Y[:, Kp:]
        # Cross power spectrum Gxy = X * conj(Y)   (f32 elementwise).
        Gr = Xr * Yr + Xi * Yi
        Gi = Xi * Yr - Xr * Yi
        # PHAT weighting: phi = 1 / (|Gxy| + eps)  (epsilon added after sqrt,
        # matching the reference).  Padded-k entries give W = 0 * (1/eps) = 0.
        phi = pl.reciprocal(jnp.sqrt(Gr * Gr + Gi * Gi) + eps_f32, approx=False)
        W = jnp.concatenate([Gr * phi, Gi * phi], axis=1)         # (TB, 2*Kp)
        W = W.astype(im_ref.dtype)
        # Inverse rDFT with the circular shift already folded into im_ref.
        o_ref[...] = jnp.dot(W, im_ref[...],
                             preferred_element_type=jnp.float32).astype(o_ref.dtype)

    def fwd(x, y):
        B = x.shape[0]
        # Batch tile: multiple of 8 sublanes, capped at a reasonable MXU M-tile.
        TB = min(128, _round_up(B, 8))
        Bp = _round_up(B, TB)
        grid = (Bp // TB,)

        x32 = jnp.asarray(x, compute_dtype)
        y32 = jnp.asarray(y, compute_dtype)
        if Bp != B:
            x32 = jnp.pad(x32, ((0, Bp - B), (0, 0)))
            y32 = jnp.pad(y32, ((0, Bp - B), (0, 0)))

        fx_j = jnp.asarray(Fx)
        fy_j = jnp.asarray(Fy)
        im_j = jnp.asarray(IM)

        itemsize = np.dtype(np_dtype).itemsize
        mat_bytes = (Tx * 2 * Kp + Ty * 2 * Kp + 2 * Kp * out_pad) * itemsize
        io_bytes = 2 * (TB * Tx + TB * Ty) * itemsize + 2 * TB * out_pad * 4
        interm_bytes = 8 * TB * Kp * 4
        vmem_est = int(1.3 * (mat_bytes + io_bytes + interm_bytes)) + (4 << 20)
        vmem_limit = int(min(64 << 20, max(vmem_est, 32 << 20)))

        flops = 2 * Bp * (Tx * 2 * Kp + Ty * 2 * Kp + 2 * Kp * out_pad) \
            + 12 * Bp * Kp
        cost = pl.CostEstimate(
            flops=int(flops),
            transcendentals=int(2 * Bp * Kp),
            bytes_accessed=int((Bp * Tx + Bp * Ty) * itemsize
                               + Bp * out_pad * 4 + mat_bytes),
        )

        in_specs = [
            pl.BlockSpec((TB, Tx), lambda b: (b, 0)),          # x batch tile
            pl.BlockSpec((TB, Ty), lambda b: (b, 0)),          # y batch tile
            pl.BlockSpec((Tx, 2 * Kp), lambda b: (0, 0)),      # Fx (resident)
            pl.BlockSpec((Ty, 2 * Kp), lambda b: (0, 0)),      # Fy (resident)
            pl.BlockSpec((2 * Kp, out_pad), lambda b: (0, 0)),  # IM (resident)
        ]
        out_spec = pl.BlockSpec((TB, out_pad), lambda b: (b, 0))

        out = pl.pallas_call(
            kernel,
            out_shape=jax.ShapeDtypeStruct((Bp, out_pad), jnp.float32),
            grid=grid,
            in_specs=in_specs,
            out_specs=out_spec,
            compiler_params=pltpu.CompilerParams(
                dimension_semantics=("parallel",),
                vmem_limit_bytes=vmem_limit,
            ),
            cost_estimate=cost,
        )(x32, y32, fx_j, fy_j, im_j)

        # Strip batch and lane padding in the wrapper.
        return out[:B, :out_len]

    return fwd


def gcc_time_reference(x, y, epsilon=1e-3):
    """Pure-JAX (FFT based) reference mirroring the PyTorch forward."""
    n = x.shape[-1] + y.shape[-1]
    X = jnp.fft.rfft(x, n=n)
    Y = jnp.fft.rfft(y, n=n)
    Gxy = X * jnp.conj(Y)
    phi = 1.0 / (jnp.abs(Gxy) + epsilon)
    cc = jnp.fft.irfft(Gxy * phi, n)
    max_shift = n // 2
    return jnp.concatenate([cc[:, -max_shift:], cc[:, :max_shift + 1]], axis=-1)


if __name__ == "__main__":
    B, T = 2, 8  # batch=2, seq=8 per signal -> n=16, output length 17
    key = jax.random.PRNGKey(0)
    kx, ky = jax.random.split(key)
    x = jax.random.normal(kx, (B, T), dtype=jnp.float32)
    y = jax.random.normal(ky, (B, T), dtype=jnp.float32)

    gcc = make_gcc_time(T, T, epsilon=1e-3)
    out = gcc(x, y)
    out = jax.block_until_ready(out)

    ref = jax.block_until_ready(gcc_time_reference(x, y, epsilon=1e-3))
    assert out.shape == ref.shape, (out.shape, ref.shape)
    np.testing.assert_allclose(np.asarray(out), np.asarray(ref),
                               rtol=1e-4, atol=1e-4)
    print("KERNEL_OK")
</pallas_src>

<mosaic_0001>
module attributes {stable_mosaic.version = 11 : i64} {
  func.func @kernel(%arg0: i32, %arg1: memref<8x8xf32, #tpu.memory_space<vmem>>, %arg2: memref<8x8xf32, #tpu.memory_space<vmem>>, %arg3: memref<8x256xf32, #tpu.memory_space<vmem>>, %arg4: memref<8x256xf32, #tpu.memory_space<vmem>>, %arg5: memref<256x128xf32, #tpu.memory_space<vmem>>, %arg6: memref<8x128xf32, #tpu.memory_space<vmem>>) attributes {dimension_semantics = [#tpu.dimension_semantics<parallel>], iteration_bounds = array<i64: 1>, scalar_prefetch = 0 : i64, scratch_operands = 0 : i64, tpu.core_type = #tpu.core_type<tc>, window_params = [{transform_indices = @transform_0, window_bounds = array<i64: 8, 8>}, {transform_indices = @transform_1, window_bounds = array<i64: 8, 8>}, {pipeline_mode = #tpu.pipeline_mode<synchronous>, transform_indices = @transform_2, window_bounds = array<i64: 8, 256>}, {pipeline_mode = #tpu.pipeline_mode<synchronous>, transform_indices = @transform_3, window_bounds = array<i64: 8, 256>}, {pipeline_mode = #tpu.pipeline_mode<synchronous>, transform_indices = @transform_4, window_bounds = array<i64: 256, 128>}, {transform_indices = @transform_5, window_bounds = array<i64: 8, 128>}]} {
    %c0 = arith.constant 0 : index
    %c0_0 = arith.constant 0 : index
    %0 = vector.load %arg1[%c0, %c0_0] : memref<8x8xf32, #tpu.memory_space<vmem>>, vector<8x8xf32>
    %c0_1 = arith.constant 0 : index
    %c0_2 = arith.constant 0 : index
    %1 = vector.load %arg3[%c0_1, %c0_2] : memref<8x256xf32, #tpu.memory_space<vmem>>, vector<8x256xf32>
    %cst = arith.constant dense<0.000000e+00> : vector<8x256xf32>
    %2 = tpu.matmul %0, %1, %cst {dimension_numbers = #tpu.dot_dimension_numbers<[1], [0], [0], [1], [0, 0, 1, 1], [], []>} : vector<8x8xf32>, vector<8x256xf32>, vector<8x256xf32> -> vector<8x256xf32>
    %c0_3 = arith.constant 0 : index
    %c0_4 = arith.constant 0 : index
    %3 = vector.load %arg2[%c0_3, %c0_4] : memref<8x8xf32, #tpu.memory_space<vmem>>, vector<8x8xf32>
    %c0_5 = arith.constant 0 : index
    %c0_6 = arith.constant 0 : index
    %4 = vector.load %arg4[%c0_5, %c0_6] : memref<8x256xf32, #tpu.memory_space<vmem>>, vector<8x256xf32>
    %cst_7 = arith.constant dense<0.000000e+00> : vector<8x256xf32>
    %5 = tpu.matmul %3, %4, %cst_7 {dimension_numbers = #tpu.dot_dimension_numbers<[1], [0], [0], [1], [0, 0, 1, 1], [], []>} : vector<8x8xf32>, vector<8x256xf32>, vector<8x256xf32> -> vector<8x256xf32>
    %6 = vector.extract_strided_slice %2 {offsets = [0, 0], sizes = [8, 128], strides = [1, 1]} : vector<8x256xf32> to vector<8x128xf32>
    %7 = vector.extract_strided_slice %2 {offsets = [0, 128], sizes = [8, 128], strides = [1, 1]} : vector<8x256xf32> to vector<8x128xf32>
    %8 = vector.extract_strided_slice %5 {offsets = [0, 0], sizes = [8, 128], strides = [1, 1]} : vector<8x256xf32> to vector<8x128xf32>
    %9 = vector.extract_strided_slice %5 {offsets = [0, 128], sizes = [8, 128], strides = [1, 1]} : vector<8x256xf32> to vector<8x128xf32>
    %10 = arith.mulf %6, %8 : vector<8x128xf32>
    %11 = arith.mulf %7, %9 : vector<8x128xf32>
    %12 = arith.addf %10, %11 : vector<8x128xf32>
    %13 = arith.mulf %7, %8 : vector<8x128xf32>
    %14 = arith.mulf %6, %9 : vector<8x128xf32>
    %15 = arith.subf %13, %14 : vector<8x128xf32>
    %16 = arith.mulf %12, %12 : vector<8x128xf32>
    %17 = arith.mulf %15, %15 : vector<8x128xf32>
    %18 = arith.addf %16, %17 : vector<8x128xf32>
    %19 = math.sqrt %18 : vector<8x128xf32>
    %cst_8 = arith.constant 1.000000e-03 : f32
    %20 = vector.broadcast %cst_8 : f32 to vector<8x128xf32>
    %21 = arith.addf %19, %20 : vector<8x128xf32>
    %22 = tpu.reciprocal %21 : vector<8x128xf32> -> vector<8x128xf32>
    %23 = arith.mulf %12, %22 : vector<8x128xf32>
    %24 = arith.mulf %15, %22 : vector<8x128xf32>
    %25 = tpu.concatenate %23, %24 in 1 : vector<8x128xf32>, vector<8x128xf32> -> vector<8x256xf32>
    %c0_9 = arith.constant 0 : index
    %c0_10 = arith.constant 0 : index
    %26 = vector.load %arg5[%c0_9, %c0_10] : memref<256x128xf32, #tpu.memory_space<vmem>>, vector<256x128xf32>
    %cst_11 = arith.constant dense<0.000000e+00> : vector<8x128xf32>
    %27 = tpu.matmul %25, %26, %cst_11 {dimension_numbers = #tpu.dot_dimension_numbers<[1], [0], [0], [1], [0, 0, 1, 1], [], []>} : vector<8x256xf32>, vector<256x128xf32>, vector<8x128xf32> -> vector<8x128xf32>
    %c0_12 = arith.constant 0 : index
    %c0_13 = arith.constant 0 : index
    %28 = vector.load %arg6[%c0_12, %c0_13] : memref<8x128xf32, #tpu.memory_space<vmem>>, vector<8x128xf32>
    tpu.vector_store %arg6[%c0_12, %c0_13], %27 {strides = array<i32>} : memref<8x128xf32, #tpu.memory_space<vmem>>, vector<8x128xf32>,
    return
  }
  func.func @transform_0(%arg0: i32) -> (i32, i32) {
    %c0_i32 = arith.constant 0 : i32
    %c0_i32_0 = arith.constant 0 : i32
    return %arg0, %c0_i32 : i32, i32
  }
  func.func @transform_1(%arg0: i32) -> (i32, i32) {
    %c0_i32 = arith.constant 0 : i32
    %c0_i32_0 = arith.constant 0 : i32
    return %arg0, %c0_i32 : i32, i32
  }
  func.func @transform_2(%arg0: i32) -> (i32, i32) {
    %c0_i32 = arith.constant 0 : i32
    %c0_i32_0 = arith.constant 0 : i32
    %c0_i32_1 = arith.constant 0 : i32
    return %c0_i32, %c0_i32_0 : i32, i32
  }
  func.func @transform_3(%arg0: i32) -> (i32, i32) {
    %c0_i32 = arith.constant 0 : i32
    %c0_i32_0 = arith.constant 0 : i32
    %c0_i32_1 = arith.constant 0 : i32
    return %c0_i32, %c0_i32_0 : i32, i32
  }
  func.func @transform_4(%arg0: i32) -> (i32, i32) {
    %c0_i32 = arith.constant 0 : i32
    %c0_i32_0 = arith.constant 0 : i32
    %c0_i32_1 = arith.constant 0 : i32
    return %c0_i32, %c0_i32_0 : i32, i32
  }
  func.func @transform_5(%arg0: i32) -> (i32, i32) {
    %c0_i32 = arith.constant 0 : i32
    %c0_i32_0 = arith.constant 0 : i32
    return %arg0, %c0_i32 : i32, i32
  }
}

</mosaic_0001>

<llo_original>
// kernel: tpu_custom_call.1
$region0: #{tpu_custom_call.1}
  #allocation0 [shape = 'u32[]', space=smem, size = 0x4, offset = 0x4, fixed_abs, tag = 'smem constant byte address 0x4 - core index']
  #allocation1 [shape = 'u32[144,128]{1,0:T(1,128)}', space=vmem, size = 0x12000, scoped, tag = 'internal scratch']
  %s0 = inlined_call_operand.hbm [shape: f32[8,8], index: 0, kind: input, shape index: {}]
  %s1 = inlined_call_operand.hbm [shape: f32[8,8], index: 1, kind: input, shape index: {}]
  %s2 = inlined_call_operand.hbm [shape: f32[8,256], index: 2, kind: input, shape index: {}]
  %s3 = inlined_call_operand.hbm [shape: f32[8,256], index: 3, kind: input, shape index: {}]
  %s4 = inlined_call_operand.hbm [shape: f32[256,128], index: 4, kind: input, shape index: {}]
  %s5 = inlined_call_operand.hbm [shape: f32[8,128], index: 5, kind: output, shape index: {}]
  %s6 = sld [smem:[#allocation0]]
  $region50: #{tpu_custom_call.1} parent=0
    _
  %s8 = ssub.s32 1, %s6
  %s9 = scalar_select 0, %s8, %s6
  $region1: #{tpu_custom_call.1} parent=0
    #allocation2 [shape = 'u8[4096]{0}', space=vmem, size = 0x1000, scoped, tag = 'input window, operand 0, single buffered']
    #allocation3 [shape = 's32[1]{0}', space=sflag, size = 0x4, scoped, tag = 'scoped memory for tpu_custom_call.1']
    #allocation4 [shape = 's32[1]{0}', space=sflag, size = 0x4, scoped, tag = 'scoped memory for tpu_custom_call.1']
    #allocation5 [shape = 'u8[4096]{0}', space=vmem, size = 0x1000, scoped, tag = 'input window, operand 1, single buffered']
    #allocation6 [shape = 's32[1]{0}', space=sflag, size = 0x4, scoped, tag = 'scoped memory for tpu_custom_call.1']
    #allocation7 [shape = 'u8[8192]{0}', space=vmem, size = 0x2000, scoped, tag = 'input window, operand 2, single buffered']
    #allocation8 [shape = 'u8[8192]{0}', space=vmem, size = 0x2000, scoped, tag = 'input window, operand 3, single buffered']
    #allocation9 [shape = 's32[1]{0}', space=sflag, size = 0x4, scoped, tag = 'scoped memory for tpu_custom_call.1']
    #allocation10 [shape = 'u8[131072]{0}', space=vmem, size = 0x20000, scoped, tag = 'input window, operand 4, single buffered']
    #allocation11 [shape = 'u8[4096]{0}', space=vmem, size = 0x1000, scoped, tag = 'output window, operand 0, single buffered']
    %10 = vsyncpa [#allocation3], 0
    %11 = vsyncpa [#allocation6], 0
    %12 = vsyncpa [#allocation9], 0
    %13 = vsyncpa [#allocation4], 0
    // Predicated region
    $region2: #{tpu_custom_call.1} parent=1 // pred_check
      _
    $region3: #{tpu_custom_call.1} parent=1 // pred_check_branch
      %15 = sbr.rel (0) target = $region5
    $region4: #{tpu_custom_call.1} parent=1 // pred_region
      %s17 = ssub.s32 128, 128
      %18 = vsyncadd [#allocation3], %s17
      %s20 = sshll.u32 [#allocation2], 4
      %s21 = int_to_ptr.vmem [resolvable:$true] %s20
      %23 = dma.hbm_to_vmem [thread:$0]  %s0, 128, %s21, [#allocation3]
    $region5: #{tpu_custom_call.1} parent=1 // pred_fallthru
      _
    // Predicated region
    $region6: #{tpu_custom_call.1} parent=1 // pred_check
      _
    $region7: #{tpu_custom_call.1} parent=1 // pred_check_branch
      %25 = sbr.rel (0) target = $region9
    $region8: #{tpu_custom_call.1} parent=1 // pred_region
      %s27 = ssub.s32 128, 128
      %28 = vsyncadd [#allocation6], %s27
      %s30 = sshll.u32 [#allocation5], 4
      %s31 = int_to_ptr.vmem [resolvable:$true] %s30
      %33 = dma.hbm_to_vmem [thread:$0]  %s1, 128, %s31, [#allocation6]
    $region9: #{tpu_custom_call.1} parent=1 // pred_fallthru
      _
    // Predicated region
    $region10: #{tpu_custom_call.1} parent=1 // pred_check
      _
    $region11: #{tpu_custom_call.1} parent=1 // pred_check_branch
      %35 = sbr.rel (0) target = $region13
    $region12: #{tpu_custom_call.1} parent=1 // pred_region
      %s37 = ssub.s32 256, 256
      %38 = vsyncadd [#allocation6], %s37
      %s40 = sshll.u32 [#allocation7], 4
      %s41 = int_to_ptr.vmem [resolvable:$true] %s40
      %43 = dma.hbm_to_vmem [thread:$0]  %s2, 256, %s41, [#allocation6]
    $region13: #{tpu_custom_call.1} parent=1 // pred_fallthru
      _
    // Predicated region
    $region14: #{tpu_custom_call.1} parent=1 // pred_check
      _
    $region15: #{tpu_custom_call.1} parent=1 // pred_check_branch
      %45 = sbr.rel (0) target = $region17
    $region16: #{tpu_custom_call.1} parent=1 // pred_region
      %s47 = ssub.s32 256, 256
      %48 = vsyncadd [#allocation9], %s47
      %s50 = sshll.u32 [#allocation8], 4
      %s51 = int_to_ptr.vmem [resolvable:$true] %s50
      %53 = dma.hbm_to_vmem [thread:$0]  %s3, 256, %s51, [#allocation9]
    $region17: #{tpu_custom_call.1} parent=1 // pred_fallthru
      _
    // Predicated region
    $region18: #{tpu_custom_call.1} parent=1 // pred_check
      _
    $region19: #{tpu_custom_call.1} parent=1 // pred_check_branch
      %55 = sbr.rel (0) target = $region21
    $region20: #{tpu_custom_call.1} parent=1 // pred_region
      %s57 = ssub.s32 4096, 4096
      %58 = vsyncadd [#allocation9], %s57
      %s59 = sshll.u32 [#allocation10], 4
      %s60 = int_to_ptr.vmem [resolvable:$true] %s59
      %65 = dma.hbm_to_vmem [thread:$0]  %s4, 4096, %s60, [#allocation9], 128, 128, 8
    $region21: #{tpu_custom_call.1} parent=1 // pred_fallthru
      _
    // Predicated region
    $region22: #{tpu_custom_call.1} parent=1 // pred_check
      _
    $region23: #{tpu_custom_call.1} parent=1 // pred_check_branch
      %67 = sbr.rel (0) target = $region25
    $region24: #{tpu_custom_call.1} parent=1 // pred_region
      %68 = dma.done [#allocation3], 128
    $region25: #{tpu_custom_call.1} parent=1 // pred_fallthru
      _
    // Predicated region
    $region26: #{tpu_custom_call.1} parent=1 // pred_check
      _
    $region27: #{tpu_custom_call.1} parent=1 // pred_check_branch
      %70 = sbr.rel (0) target = $region29
    $region28: #{tpu_custom_call.1} parent=1 // pred_region
      %71 = dma.done [#allocation6], 128
    $region29: #{tpu_custom_call.1} parent=1 // pred_fallthru
      _
    // Predicated region
    $region30: #{tpu_custom_call.1} parent=1 // pred_check
      _
    $region31: #{tpu_custom_call.1} parent=1 // pred_check_branch
      %73 = sbr.rel (0) target = $region33
    $region32: #{tpu_custom_call.1} parent=1 // pred_region
      %74 = dma.done [#allocation6], 256
    $region33: #{tpu_custom_call.1} parent=1 // pred_fallthru
      _
    // Predicated region
    $region34: #{tpu_custom_call.1} parent=1 // pred_check
      _
    $region35: #{tpu_custom_call.1} parent=1 // pred_check_branch
      %76 = sbr.rel (0) target = $region37
    $region36: #{tpu_custom_call.1} parent=1 // pred_region
      %77 = dma.done [#allocation9], 256
    $region37: #{tpu_custom_call.1} parent=1 // pred_fallthru
      _
    // Predicated region
    $region38: #{tpu_custom_call.1} parent=1 // pred_check
      _
    $region39: #{tpu_custom_call.1} parent=1 // pred_check_branch
      %79 = sbr.rel (0) target = $region41
    $region40: #{tpu_custom_call.1} parent=1 // pred_region
      %80 = dma.done [#allocation9], 4096
    $region41: #{tpu_custom_call.1} parent=1 // pred_fallthru
      _
    %v81 = vld [vmem:[#allocation2] sm:$0xff]
    %v82 = vld [vmem:[#allocation7] sm:$0xff]
    %v83 = vld [vmem:[#allocation7 + $0x8] sm:$0xff]
    %vm84 = vcmask 64512
    %v86 = vsel %vm84, %v81, 0
    %88 = vmatprep.subr.mxu0 %v83
    %89 = vmatpush1.msra.mxu0 %v82
    %90 = vmatprep.subr.mxu0 0.0
    %91 = vmatpush1.msra.mxu0 0.0
    %92 = vmatprep.subr.mxu0 0.0
    %93 = vmatpush1.msra.mxu0 0.0
    %94 = vmatprep.subr.mxu0 0.0
    %95 = vmatpush1.msra.mxu0 0.0
    %96 = vmatprep.subr.mxu0 0.0
    %97 = vmatpush1.msra.mxu0 0.0
    %98 = vmatprep.subr.mxu0 0.0
    %99 = vmatpush1.msra.mxu0 0.0
    %100 = vmatprep.subr.mxu0 0.0
    %101 = vmatpush1.msra.mxu0 0.0
    %102 = vmatprep.subr.mxu0 0.0
    %103 = vmatpush1.msra.mxu0 0.0
    %104 = vmatprep.subr.mxu0 0.0
    %105 = vmatpush1.msra.mxu0 0.0
    %106 = vmatprep.subr.mxu0 0.0
    %107 = vmatpush1.msra.mxu0 0.0
    %108 = vmatprep.subr.mxu0 0.0
    %109 = vmatpush1.msra.mxu0 0.0
    %110 = vmatprep.subr.mxu0 0.0
    %111 = vmatpush1.msra.mxu0 0.0
    %112 = vmatprep.subr.mxu0 0.0
    %113 = vmatpush1.msra.mxu0 0.0
    %114 = vmatprep.subr.mxu0 0.0
    %115 = vmatpush1.msra.mxu0 0.0
    %116 = vmatprep.subr.mxu0 0.0
    %117 = vmatpush1.msra.mxu0 0.0
    %118 = vmatprep.subr.mxu0 0.0
    %119 = vmatpush1.msra.mxu0 0.0
    %120 = vmatprep.subr.mxu0 0.0
    %121 = vmatpush1.msra.mxu0 0.0
    %122 = vmatprep.subr.mxu0 0.0
    %123 = vmatpush1.msra.mxu0 0.0
    %124 = vmatprep.subr.mxu0 0.0
    %125 = vmatpush1.msra.mxu0 0.0
    %126 = vmatprep.subr.mxu0 0.0
    %127 = vmatpush1.msra.mxu0 0.0
    %128 = vmatprep.subr.mxu0 0.0
    %129 = vmatpush1.msra.mxu0 0.0
    %130 = vmatprep.subr.mxu0 0.0
    %131 = vmatpush1.msra.mxu0 0.0
    %132 = vmatprep.subr.mxu0 0.0
    %133 = vmatpush1.msra.mxu0 0.0
    %134 = vmatprep.subr.mxu0 0.0
    %135 = vmatpush1.msra.mxu0 0.0
    %136 = vmatprep.subr.mxu0 0.0
    %137 = vmatpush1.msra.mxu0 0.0
    %138 = vmatprep.subr.mxu0 0.0
    %139 = vmatpush1.msra.mxu0 0.0
    %140 = vmatprep.subr.mxu0 0.0
    %141 = vmatpush1.msra.mxu0 0.0
    %142 = vmatprep.subr.mxu0 0.0
    %143 = vmatpush1.msra.mxu0 0.0
    %144 = vmatprep.subr.mxu0 0.0
    %145 = vmatpush1.msra.mxu0 0.0
    %146 = vmatprep.subr.mxu0 0.0
    %147 = vmatpush1.msra.mxu0 0.0
    %148 = vmatprep.subr.mxu0 0.0
    %149 = vmatpush1.msra.mxu0 0.0
    %150 = vmatprep.subr.mxu0 0.0
    %151 = vmatpush1.msra.mxu0 0.0
    %152 = vmatprep.mubr.f32.mxu0 0.0
    %153 = vmatmul.mubr.f32.gmra.mrb[0].mxu0 %v86
    %v154 = vpop.f32.mrb[0].mxu0
    %v155 = vadd.f32 0.0, %v154
    %v156 = vpop.f32.mrb[0].mxu0
    %v157 = vadd.f32 0.0, %v156
    %158 = vdwg.mxu0
    %v159 = vld [vmem:[#allocation5] sm:$0xff]
    %v160 = vld [vmem:[#allocation8] sm:$0xff]
    %v161 = vld [vmem:[#allocation8 + $0x8] sm:$0xff]
    %v163 = vsel %vm84, %v159, 0
    %165 = vmatprep.subr.mxu0 %v161
    %166 = vmatpush1.msra.mxu0 %v160
    %167 = vmatprep.subr.mxu0 0.0
    %168 = vmatpush1.msra.mxu0 0.0
    %169 = vmatprep.subr.mxu0 0.0
    %170 = vmatpush1.msra.mxu0 0.0
    %171 = vmatprep.subr.mxu0 0.0
    %172 = vmatpush1.msra.mxu0 0.0
    %173 = vmatprep.subr.mxu0 0.0
    %174 = vmatpush1.msra.mxu0 0.0
    %175 = vmatprep.subr.mxu0 0.0
    %176 = vmatpush1.msra.mxu0 0.0
    %177 = vmatprep.subr.mxu0 0.0
    %178 = vmatpush1.msra.mxu0 0.0
    %179 = vmatprep.subr.mxu0 0.0
    %180 = vmatpush1.msra.mxu0 0.0
    %181 = vmatprep.subr.mxu0 0.0
    %182 = vmatpush1.msra.mxu0 0.0
    %183 = vmatprep.subr.mxu0 0.0
    %184 = vmatpush1.msra.mxu0 0.0
    %185 = vmatprep.subr.mxu0 0.0
    %186 = vmatpush1.msra.mxu0 0.0
    %187 = vmatprep.subr.mxu0 0.0
    %188 = vmatpush1.msra.mxu0 0.0
    %189 = vmatprep.subr.mxu0 0.0
    %190 = vmatpush1.msra.mxu0 0.0
    %191 = vmatprep.subr.mxu0 0.0
    %192 = vmatpush1.msra.mxu0 0.0
    %193 = vmatprep.subr.mxu0 0.0
    %194 = vmatpush1.msra.mxu0 0.0
    %195 = vmatprep.subr.mxu0 0.0
    %196 = vmatpush1.msra.mxu0 0.0
    %197 = vmatprep.subr.mxu0 0.0
    %198 = vmatpush1.msra.mxu0 0.0
    %199 = vmatprep.subr.mxu0 0.0
    %200 = vmatpush1.msra.mxu0 0.0
    %201 = vmatprep.subr.mxu0 0.0
    %202 = vmatpush1.msra.mxu0 0.0
    %203 = vmatprep.subr.mxu0 0.0
    %204 = vmatpush1.msra.mxu0 0.0
    %205 = vmatprep.subr.mxu0 0.0
    %206 = vmatpush1.msra.mxu0 0.0
    %207 = vmatprep.subr.mxu0 0.0
    %208 = vmatpush1.msra.mxu0 0.0
    %209 = vmatprep.subr.mxu0 0.0
    %210 = vmatpush1.msra.mxu0 0.0
    %211 = vmatprep.subr.mxu0 0.0
    %212 = vmatpush1.msra.mxu0 0.0
    %213 = vmatprep.subr.mxu0 0.0
    %214 = vmatpush1.msra.mxu0 0.0
    %215 = vmatprep.subr.mxu0 0.0
    %216 = vmatpush1.msra.mxu0 0.0
    %217 = vmatprep.subr.mxu0 0.0
    %218 = vmatpush1.msra.mxu0 0.0
    %219 = vmatprep.subr.mxu0 0.0
    %220 = vmatpush1.msra.mxu0 0.0
    %221 = vmatprep.subr.mxu0 0.0
    %222 = vmatpush1.msra.mxu0 0.0
    %223 = vmatprep.subr.mxu0 0.0
    %224 = vmatpush1.msra.mxu0 0.0
    %225 = vmatprep.subr.mxu0 0.0
    %226 = vmatpush1.msra.mxu0 0.0
    %227 = vmatprep.subr.mxu0 0.0
    %228 = vmatpush1.msra.mxu0 0.0
    %229 = vmatprep.mubr.f32.mxu0 0.0
    %230 = vmatmul.mubr.f32.gmra.mrb[0].mxu0 %v163
    %v231 = vpop.f32.mrb[0].mxu0
    %v232 = vadd.f32 0.0, %v231
    %v233 = vpop.f32.mrb[0].mxu0
    %v234 = vadd.f32 0.0, %v233
    %235 = vdwg.mxu0
    %v236 = vmul.f32 %v155, %v232
    %v237 = vmul.f32 %v157, %v234
    %v238 = vadd.f32 %v236, %v237
    %v239 = vmul.f32 %v157, %v232
    %v240 = vmul.f32 %v155, %v234
    %v241 = vsub.f32 %v239, %v240
    %v242 = vmul.f32 %v238, %v238
    %v243 = vmul.f32 %v241, %v241
    %v244 = vadd.f32 %v242, %v243
    %v245 = vrsqrt.pop %v244
    %v246 = vmul.f32 %v244, %v245
    %vm247 = vcmp.eq.f32.partialorder %v244, inf
    %v248 = vsel %vm247, %v244, %v246
    %vm249 = vcmp.eq.f32.partialorder %v244, 0.0
    %v250 = vand.u32 %v244, 2147483648
    %v251 = vsel %vm249, %v250, %v248
    %v252 = vadd.f32 %v251, 0.001
    %v253 = vrcp.pop %v252
    %v254 = vmul.f32 %v238, %v253
    %v255 = vmul.f32 %v241, %v253
    %v256 = vld [vmem:[#allocation10] sm:$0xff]
    %v257 = vld [vmem:[#allocation10 + $0x8] sm:$0xff]
    %v258 = vld [vmem:[#allocation10 + $0x10] sm:$0xff]
    %v259 = vld [vmem:[#allocation10 + $0x18] sm:$0xff]
    %v260 = vld [vmem:[#allocation10 + $0x20] sm:$0xff]
    %v261 = vld [vmem:[#allocation10 + $0x28] sm:$0xff]
    %v262 = vld [vmem:[#allocation10 + $0x30] sm:$0xff]
    %v263 = vld [vmem:[#allocation10 + $0x38] sm:$0xff]
    %v264 = vld [vmem:[#allocation10 + $0x40] sm:$0xff]
    %v265 = vld [vmem:[#allocation10 + $0x48] sm:$0xff]
    %v266 = vld [vmem:[#allocation10 + $0x50] sm:$0xff]
    %v267 = vld [vmem:[#allocation10 + $0x58] sm:$0xff]
    %v268 = vld [vmem:[#allocation10 + $0x60] sm:$0xff]
    %v269 = vld [vmem:[#allocation10 + $0x68] sm:$0xff]
    %v270 = vld [vmem:[#allocation10 + $0x70] sm:$0xff]
    %v271 = vld [vmem:[#allocation10 + $0x78] sm:$0xff]
    %v272 = vld [vmem:[#allocation10 + $0x80] sm:$0xff]
    %v273 = vld [vmem:[#allocation10 + $0x88] sm:$0xff]
    %v274 = vld [vmem:[#allocation10 + $0x90] sm:$0xff]
    %v275 = vld [vmem:[#allocation10 + $0x98] sm:$0xff]
    %v276 = vld [vmem:[#allocation10 + $0xa0] sm:$0xff]
    %v277 = vld [vmem:[#allocation10 + $0xa8] sm:$0xff]
    %v278 = vld [vmem:[#allocation10 + $0xb0] sm:$0xff]
    %v279 = vld [vmem:[#allocation10 + $0xb8] sm:$0xff]
    %v280 = vld [vmem:[#allocation10 + $0xc0] sm:$0xff]
    %v281 = vld [vmem:[#allocation10 + $0xc8] sm:$0xff]
    %v282 = vld [vmem:[#allocation10 + $0xd0] sm:$0xff]
    %v283 = vld [vmem:[#allocation10 + $0xd8] sm:$0xff]
    %v284 = vld [vmem:[#allocation10 + $0xe0] sm:$0xff]
    %v285 = vld [vmem:[#allocation10 + $0xe8] sm:$0xff]
    %v286 = vld [vmem:[#allocation10 + $0xf0] sm:$0xff]
    %v287 = vld [vmem:[#allocation10 + $0xf8] sm:$0xff]
    %288 = vmatprep.subr.mxu0 0.0
    %289 = vmatpush1.msra.mxu0 %v256
    %290 = vmatprep.subr.mxu0 0.0
    %291 = vmatpush1.msra.mxu0 %v257
    %292 = vmatprep.subr.mxu0 0.0
    %293 = vmatpush1.msra.mxu0 %v258
    %294 = vmatprep.subr.mxu0 0.0
    %295 = vmatpush1.msra.mxu0 %v259
    %296 = vmatprep.subr.mxu0 0.0
    %297 = vmatpush1.msra.mxu0 %v260
    %298 = vmatprep.subr.mxu0 0.0
    %299 = vmatpush1.msra.mxu0 %v261
    %300 = vmatprep.subr.mxu0 0.0
    %301 = vmatpush1.msra.mxu0 %v262
    %302 = vmatprep.subr.mxu0 0.0
    %303 = vmatpush1.msra.mxu0 %v263
    %304 = vmatprep.subr.mxu0 0.0
    %305 = vmatpush1.msra.mxu0 %v264
    %306 = vmatprep.subr.mxu0 0.0
    %307 = vmatpush1.msra.mxu0 %v265
    %308 = vmatprep.subr.mxu0 0.0
    %309 = vmatpush1.msra.mxu0 %v266
    %310 = vmatprep.subr.mxu0 0.0
    %311 = vmatpush1.msra.mxu0 %v267
    %312 = vmatprep.subr.mxu0 0.0
    %313 = vmatpush1.msra.mxu0 %v268
    %314 = vmatprep.subr.mxu0 0.0
    %315 = vmatpush1.msra.mxu0 %v269
    %316 = vmatprep.subr.mxu0 0.0
    %317 = vmatpush1.msra.mxu0 %v270
    %318 = vmatprep.subr.mxu0 0.0
    %319 = vmatpush1.msra.mxu0 %v271
    %320 = vmatprep.subr.mxu0 0.0
    %321 = vmatpush1.msra.mxu0 %v272
    %322 = vmatprep.subr.mxu0 0.0
    %323 = vmatpush1.msra.mxu0 %v273
    %324 = vmatprep.subr.mxu0 0.0
    %325 = vmatpush1.msra.mxu0 %v274
    %326 = vmatprep.subr.mxu0 0.0
    %327 = vmatpush1.msra.mxu0 %v275
    %328 = vmatprep.subr.mxu0 0.0
    %329 = vmatpush1.msra.mxu0 %v276
    %330 = vmatprep.subr.mxu0 0.0
    %331 = vmatpush1.msra.mxu0 %v277
    %332 = vmatprep.subr.mxu0 0.0
    %333 = vmatpush1.msra.mxu0 %v278
    %334 = vmatprep.subr.mxu0 0.0
    %335 = vmatpush1.msra.mxu0 %v279
    %336 = vmatprep.subr.mxu0 0.0
    %337 = vmatpush1.msra.mxu0 %v280
    %338 = vmatprep.subr.mxu0 0.0
    %339 = vmatpush1.msra.mxu0 %v281
    %340 = vmatprep.subr.mxu0 0.0
    %341 = vmatpush1.msra.mxu0 %v282
    %342 = vmatprep.subr.mxu0 0.0
    %343 = vmatpush1.msra.mxu0 %v283
    %344 = vmatprep.subr.mxu0 0.0
    %345 = vmatpush1.msra.mxu0 %v284
    %346 = vmatprep.subr.mxu0 0.0
    %347 = vmatpush1.msra.mxu0 %v285
    %348 = vmatprep.subr.mxu0 0.0
    %349 = vmatpush1.msra.mxu0 %v286
    %350 = vmatprep.subr.mxu0 0.0
    %351 = vmatpush1.msra.mxu0 %v287
    %352 = vmatprep.mubr.f32.mxu0 %v255
    %353 = vmatmul.mubr.f32.gmra.mrb[0].mxu0 %v254
    %v354 = vpop.f32.mrb[0].mxu0
    %v355 = vadd.f32 0.0, %v354
    %v356 = vpop.f32.mrb[0].mxu0
    %357 = vdwg.mxu0
    %358 = vst [vmem:[#allocation11] sm:$0xff] %v355
    // Predicated region
    $region42: #{tpu_custom_call.1} parent=1 // pred_check
      _
    $region43: #{tpu_custom_call.1} parent=1 // pred_check_branch
      %360 = sbr.rel (0) target = $region45
    $region44: #{tpu_custom_call.1} parent=1 // pred_region
      %s362 = ssub.s32 128, 128
      %363 = vsyncadd [#allocation4], %s362
      %s365 = sshll.u32 [#allocation11], 4
      %s366 = int_to_ptr.vmem [resolvable:$true] %s365
      %368 = dma.vmem_to_hbm [thread:$0]  %s366, 128, %s5, [#allocation4]
    $region45: #{tpu_custom_call.1} parent=1 // pred_fallthru
      _
    // Predicated region
    $region46: #{tpu_custom_call.1} parent=1 // pred_check
      _
    $region47: #{tpu_custom_call.1} parent=1 // pred_check_branch
      %370 = sbr.rel (0) target = $region49
    $region48: #{tpu_custom_call.1} parent=1 // pred_region
      %371 = dma.done [#allocation4], 128
    $region49: #{tpu_custom_call.1} parent=1 // pred_fallthru
      _
    %372 = vsyncpa [#allocation3], 1
    %373 = vsyncpa [#allocation6], 1
    %374 = vsyncpa [#allocation9], 1
    %375 = vsyncpa [#allocation4], 1

</llo_original>
